<compile_context>
chip_gen: v7x
topology: tpu7x:2x2x1
jax: 0.10.0
libtpu: 0.0.40
codegen_flags: <defaults>
</compile_context>

<pallas_src>
import jax
import jax.numpy as jnp
from jax.experimental import pallas as pl
from jax.experimental.pallas import tpu as pltpu

INPUT_SIZE = 4
HIDDEN1 = 3
HIDDEN2 = 2
OUTPUT_SIZE = 4
BATCH = 8

SUBLANES = 8  # f32 sublane tile height; all param columns are packed into 8 sublanes.

# Lane-column layout of the packed (8, N_COLS) parameter slab.
# p[n, W*_COL + k] = W[k, n]  (weight from input k to neuron n), rows >= fan_out are 0.
W1_COL = 0                                   # 4 columns
B1_COL = W1_COL + INPUT_SIZE                 # 4
W2_COL = B1_COL + 1                          # 5..7
B2_COL = W2_COL + HIDDEN1                    # 8
W3_COL = B2_COL + 1                          # 9..10
B3_COL = W3_COL + HIDDEN2                    # 11
N_COLS = B3_COL + 1                          # 12


def mlp_kernel(p_ref, xt_ref, ot_ref):
    """Fused 3-layer MLP on transposed activations.

    p_ref:  (8, N_COLS) f32 VMEM — sublane-packed weight/bias columns.
    xt_ref: (INPUT_SIZE, batch) f32 VMEM — x^T (features on sublanes, batch on lanes).
    ot_ref: (OUTPUT_SIZE, batch) f32 VMEM — y^T.
    """
    # fc1 + relu1: bias column seeds the accumulator; K outer-product FMAs.
    acc = p_ref[:, B1_COL:B1_COL + 1]                                  # (8, 1)
    for k in range(INPUT_SIZE):
        acc = acc + p_ref[:, W1_COL + k:W1_COL + k + 1] * xt_ref[k:k + 1, :]
    h1 = jnp.maximum(acc, 0.0)        # (8, lanes); sublanes >= HIDDEN1 are exactly 0

    # fc2 + relu2
    acc = p_ref[:, B2_COL:B2_COL + 1]
    for k in range(HIDDEN1):
        acc = acc + p_ref[:, W2_COL + k:W2_COL + k + 1] * h1[k:k + 1, :]
    h2 = jnp.maximum(acc, 0.0)        # sublanes >= HIDDEN2 are exactly 0

    # fc3 (no activation) — assemble all 4 output rows, then one store.
    acc = p_ref[:, B3_COL:B3_COL + 1]
    for k in range(HIDDEN2):
        acc = acc + p_ref[:, W3_COL + k:W3_COL + k + 1] * h2[k:k + 1, :]
    ot_ref[...] = acc[:OUTPUT_SIZE, :]


def pack_params(params):
    """One-time packing of (w1,b1,w2,b2,w3,b3) into the (8, N_COLS) slab.

    Weights are stored (in, out) = nn.Linear.weight.T; packed so column k of a
    layer holds that layer's weight row k distributed over the output sublanes.
    Call this at init / parameter-update time, NOT per forward.
    """
    w1, b1, w2, b2, w3, b3 = params
    p = jnp.zeros((SUBLANES, N_COLS), jnp.float32)
    p = p.at[:HIDDEN1, W1_COL:W1_COL + INPUT_SIZE].set(w1.T.astype(jnp.float32))
    p = p.at[:HIDDEN1, B1_COL].set(b1.reshape(-1).astype(jnp.float32))
    p = p.at[:HIDDEN2, W2_COL:W2_COL + HIDDEN1].set(w2.T.astype(jnp.float32))
    p = p.at[:HIDDEN2, B2_COL].set(b2.reshape(-1).astype(jnp.float32))
    p = p.at[:OUTPUT_SIZE, W3_COL:W3_COL + HIDDEN2].set(w3.T.astype(jnp.float32))
    p = p.at[:OUTPUT_SIZE, B3_COL].set(b3.reshape(-1).astype(jnp.float32))
    return p


def simple_nn_forward_t(xt, packed):
    """Transposed entrypoint: xt (INPUT_SIZE, batch) -> y^T (OUTPUT_SIZE, batch).

    Zero host-side layout plumbing; everything is a full-array VMEM operand.
    """
    batch = xt.shape[1]
    return pl.pallas_call(
        mlp_kernel,
        out_shape=jax.ShapeDtypeStruct((OUTPUT_SIZE, batch), jnp.float32),
        in_specs=[
            pl.BlockSpec(memory_space=pltpu.MemorySpace.VMEM),   # packed params
            pl.BlockSpec(memory_space=pltpu.MemorySpace.VMEM),   # x^T
        ],
        out_specs=pl.BlockSpec(memory_space=pltpu.MemorySpace.VMEM),
    )(packed, xt)


def simple_nn_forward(x, packed):
    """Semantic wrapper matching the PyTorch module: (batch, 4) -> (batch, 4)."""
    return simple_nn_forward_t(x.T, packed).T


def init_params(key):
    """Deterministic init matching nn.Linear shapes (stored transposed, (in, out))."""
    k1, k2, k3, k4, k5, k6 = jax.random.split(key, 6)
    w1 = jax.random.normal(k1, (INPUT_SIZE, HIDDEN1), jnp.float32) * 0.5
    b1 = jax.random.normal(k2, (1, HIDDEN1), jnp.float32) * 0.1
    w2 = jax.random.normal(k3, (HIDDEN1, HIDDEN2), jnp.float32) * 0.5
    b2 = jax.random.normal(k4, (1, HIDDEN2), jnp.float32) * 0.1
    w3 = jax.random.normal(k5, (HIDDEN2, OUTPUT_SIZE), jnp.float32) * 0.5
    b3 = jax.random.normal(k6, (1, OUTPUT_SIZE), jnp.float32) * 0.1
    return (w1, b1, w2, b2, w3, b3)


def reference_forward(x, params):
    w1, b1, w2, b2, w3, b3 = params
    h1 = jnp.maximum(x @ w1 + b1, 0.0)
    h2 = jnp.maximum(h1 @ w2 + b2, 0.0)
    return h2 @ w3 + b3


if __name__ == "__main__":
    key = jax.random.PRNGKey(0)
    kx, kp = jax.random.split(key)
    x = jax.random.normal(kx, (BATCH, INPUT_SIZE), jnp.float32)
    params = init_params(kp)

    packed = pack_params(params)              # hoisted: packed once, reused per call
    fwd = jax.jit(simple_nn_forward)

    out = jax.block_until_ready(fwd(x, packed))

    ref = reference_forward(x, params)
    assert out.shape == (BATCH, OUTPUT_SIZE)
    assert jnp.allclose(out, ref, atol=1e-5, rtol=1e-5), "Pallas output mismatch vs reference"

    print("KERNEL_OK")
</pallas_src>

<mosaic_0001>
module attributes {stable_mosaic.version = 11 : i64} {
  func.func @mlp_kernel(%arg0: memref<8x12xf32, #tpu.memory_space<vmem>>, %arg1: memref<4x8xf32, #tpu.memory_space<vmem>>, %arg2: memref<4x8xf32, #tpu.memory_space<vmem>>) attributes {dimension_semantics = [], scalar_prefetch = 0 : i64, scratch_operands = 0 : i64, tpu.core_type = #tpu.core_type<tc>} {
    %c0 = arith.constant 0 : index
    %c4 = arith.constant 4 : index
    %0 = vector.load %arg0[%c0, %c4] : memref<8x12xf32, #tpu.memory_space<vmem>>, vector<8x1xf32>
    %c0_0 = arith.constant 0 : index
    %c0_1 = arith.constant 0 : index
    %1 = vector.load %arg0[%c0_0, %c0_1] : memref<8x12xf32, #tpu.memory_space<vmem>>, vector<8x1xf32>
    %c0_2 = arith.constant 0 : index
    %c0_3 = arith.constant 0 : index
    %2 = vector.load %arg1[%c0_2, %c0_3] : memref<4x8xf32, #tpu.memory_space<vmem>>, vector<1x8xf32>
    %3 = vector.broadcast %1 : vector<8x1xf32> to vector<8x8xf32>
    %4 = vector.broadcast %2 : vector<1x8xf32> to vector<8x8xf32>
    %5 = arith.mulf %3, %4 : vector<8x8xf32>
    %6 = vector.broadcast %0 : vector<8x1xf32> to vector<8x8xf32>
    %7 = arith.addf %6, %5 : vector<8x8xf32>
    %c0_4 = arith.constant 0 : index
    %c1 = arith.constant 1 : index
    %8 = vector.load %arg0[%c0_4, %c1] : memref<8x12xf32, #tpu.memory_space<vmem>>, vector<8x1xf32>
    %c1_5 = arith.constant 1 : index
    %c0_6 = arith.constant 0 : index
    %9 = vector.load %arg1[%c1_5, %c0_6] : memref<4x8xf32, #tpu.memory_space<vmem>>, vector<1x8xf32>
    %10 = vector.broadcast %8 : vector<8x1xf32> to vector<8x8xf32>
    %11 = vector.broadcast %9 : vector<1x8xf32> to vector<8x8xf32>
    %12 = arith.mulf %10, %11 : vector<8x8xf32>
    %13 = arith.addf %7, %12 : vector<8x8xf32>
    %c0_7 = arith.constant 0 : index
    %c2 = arith.constant 2 : index
    %14 = vector.load %arg0[%c0_7, %c2] : memref<8x12xf32, #tpu.memory_space<vmem>>, vector<8x1xf32>
    %c2_8 = arith.constant 2 : index
    %c0_9 = arith.constant 0 : index
    %15 = vector.load %arg1[%c2_8, %c0_9] : memref<4x8xf32, #tpu.memory_space<vmem>>, vector<1x8xf32>
    %16 = vector.broadcast %14 : vector<8x1xf32> to vector<8x8xf32>
    %17 = vector.broadcast %15 : vector<1x8xf32> to vector<8x8xf32>
    %18 = arith.mulf %16, %17 : vector<8x8xf32>
    %19 = arith.addf %13, %18 : vector<8x8xf32>
    %c0_10 = arith.constant 0 : index
    %c3 = arith.constant 3 : index
    %20 = vector.load %arg0[%c0_10, %c3] : memref<8x12xf32, #tpu.memory_space<vmem>>, vector<8x1xf32>
    %c3_11 = arith.constant 3 : index
    %c0_12 = arith.constant 0 : index
    %21 = vector.load %arg1[%c3_11, %c0_12] : memref<4x8xf32, #tpu.memory_space<vmem>>, vector<1x8xf32>
    %22 = vector.broadcast %20 : vector<8x1xf32> to vector<8x8xf32>
    %23 = vector.broadcast %21 : vector<1x8xf32> to vector<8x8xf32>
    %24 = arith.mulf %22, %23 : vector<8x8xf32>
    %25 = arith.addf %19, %24 : vector<8x8xf32>
    %cst = arith.constant 0.000000e+00 : f32
    %26 = vector.broadcast %cst : f32 to vector<8x8xf32>
    %27 = arith.maximumf %25, %26 : vector<8x8xf32>
    %c0_13 = arith.constant 0 : index
    %c8 = arith.constant 8 : index
    %28 = vector.load %arg0[%c0_13, %c8] : memref<8x12xf32, #tpu.memory_space<vmem>>, vector<8x1xf32>
    %c0_14 = arith.constant 0 : index
    %c5 = arith.constant 5 : index
    %29 = vector.load %arg0[%c0_14, %c5] : memref<8x12xf32, #tpu.memory_space<vmem>>, vector<8x1xf32>
    %30 = vector.extract_strided_slice %27 {offsets = [0, 0], sizes = [1, 8], strides = [1, 1]} : vector<8x8xf32> to vector<1x8xf32>
    %31 = vector.broadcast %29 : vector<8x1xf32> to vector<8x8xf32>
    %32 = vector.broadcast %30 : vector<1x8xf32> to vector<8x8xf32>
    %33 = arith.mulf %31, %32 : vector<8x8xf32>
    %34 = vector.broadcast %28 : vector<8x1xf32> to vector<8x8xf32>
    %35 = arith.addf %34, %33 : vector<8x8xf32>
    %c0_15 = arith.constant 0 : index
    %c6 = arith.constant 6 : index
    %36 = vector.load %arg0[%c0_15, %c6] : memref<8x12xf32, #tpu.memory_space<vmem>>, vector<8x1xf32>
    %37 = vector.extract_strided_slice %27 {offsets = [1, 0], sizes = [1, 8], strides = [1, 1]} : vector<8x8xf32> to vector<1x8xf32>
    %38 = vector.broadcast %36 : vector<8x1xf32> to vector<8x8xf32>
    %39 = vector.broadcast %37 : vector<1x8xf32> to vector<8x8xf32>
    %40 = arith.mulf %38, %39 : vector<8x8xf32>
    %41 = arith.addf %35, %40 : vector<8x8xf32>
    %c0_16 = arith.constant 0 : index
    %c7 = arith.constant 7 : index
    %42 = vector.load %arg0[%c0_16, %c7] : memref<8x12xf32, #tpu.memory_space<vmem>>, vector<8x1xf32>
    %43 = vector.extract_strided_slice %27 {offsets = [2, 0], sizes = [1, 8], strides = [1, 1]} : vector<8x8xf32> to vector<1x8xf32>
    %44 = vector.broadcast %42 : vector<8x1xf32> to vector<8x8xf32>
    %45 = vector.broadcast %43 : vector<1x8xf32> to vector<8x8xf32>
    %46 = arith.mulf %44, %45 : vector<8x8xf32>
    %47 = arith.addf %41, %46 : vector<8x8xf32>
    %cst_17 = arith.constant 0.000000e+00 : f32
    %48 = vector.broadcast %cst_17 : f32 to vector<8x8xf32>
    %49 = arith.maximumf %47, %48 : vector<8x8xf32>
    %c0_18 = arith.constant 0 : index
    %c11 = arith.constant 11 : index
    %50 = vector.load %arg0[%c0_18, %c11] : memref<8x12xf32, #tpu.memory_space<vmem>>, vector<8x1xf32>
    %c0_19 = arith.constant 0 : index
    %c9 = arith.constant 9 : index
    %51 = vector.load %arg0[%c0_19, %c9] : memref<8x12xf32, #tpu.memory_space<vmem>>, vector<8x1xf32>
    %52 = vector.extract_strided_slice %49 {offsets = [0, 0], sizes = [1, 8], strides = [1, 1]} : vector<8x8xf32> to vector<1x8xf32>
    %53 = vector.broadcast %51 : vector<8x1xf32> to vector<8x8xf32>
    %54 = vector.broadcast %52 : vector<1x8xf32> to vector<8x8xf32>
    %55 = arith.mulf %53, %54 : vector<8x8xf32>
    %56 = vector.broadcast %50 : vector<8x1xf32> to vector<8x8xf32>
    %57 = arith.addf %56, %55 : vector<8x8xf32>
    %c0_20 = arith.constant 0 : index
    %c10 = arith.constant 10 : index
    %58 = vector.load %arg0[%c0_20, %c10] : memref<8x12xf32, #tpu.memory_space<vmem>>, vector<8x1xf32>
    %59 = vector.extract_strided_slice %49 {offsets = [1, 0], sizes = [1, 8], strides = [1, 1]} : vector<8x8xf32> to vector<1x8xf32>
    %60 = vector.broadcast %58 : vector<8x1xf32> to vector<8x8xf32>
    %61 = vector.broadcast %59 : vector<1x8xf32> to vector<8x8xf32>
    %62 = arith.mulf %60, %61 : vector<8x8xf32>
    %63 = arith.addf %57, %62 : vector<8x8xf32>
    %64 = vector.extract_strided_slice %63 {offsets = [0, 0], sizes = [4, 8], strides = [1, 1]} : vector<8x8xf32> to vector<4x8xf32>
    %c0_21 = arith.constant 0 : index
    %c0_22 = arith.constant 0 : index
    %65 = vector.load %arg2[%c0_21, %c0_22] : memref<4x8xf32, #tpu.memory_space<vmem>>, vector<4x8xf32>
    tpu.vector_store %arg2[%c0_21, %c0_22], %64 {strides = array<i32>} : memref<4x8xf32, #tpu.memory_space<vmem>>, vector<4x8xf32>,
    return
  }
}

</mosaic_0001>

<llo_original>
// kernel: simple_nn_forward.1
$region0: #{simple_nn_forward.1}
  #allocation0 [shape = 'u32[]', space=smem, size = 0x4, offset = 0x4, fixed_abs, tag = 'smem constant byte address 0x4 - core index']
  #allocation1 [shape = 'u32[144,128]{1,0:T(1,128)}', space=vmem, size = 0x12000, scoped, tag = 'internal scratch']
  %s0 = inlined_call_operand.hbm [shape: f32[8,12], index: 0, kind: input, shape index: {}]
  %s1 = inlined_call_operand.hbm [shape: f32[4,8], index: 1, kind: input, shape index: {}]
  %s2 = inlined_call_operand.hbm [shape: f32[4,8], index: 2, kind: output, shape index: {}]
  %s3 = sld [smem:[#allocation0]]
  $region26: #{simple_nn_forward.1} parent=0
    _
  %s5 = ssub.s32 1, %s3
  %s6 = scalar_select 0, %s5, %s3
  $region1: #{simple_nn_forward.1} parent=0
    #allocation2 [shape = 'u8[4096]{0}', space=vmem, size = 0x1000, scoped, tag = 'input window, operand 0, single buffered']
    #allocation3 [shape = 's32[1]{0}', space=sflag, size = 0x4, scoped, tag = 'scoped memory for simple_nn_forward.1']
    #allocation4 [shape = 's32[1]{0}', space=sflag, size = 0x4, scoped, tag = 'scoped memory for simple_nn_forward.1']
    #allocation5 [shape = 'u8[2048]{0}', space=vmem, size = 0x800, scoped, tag = 'input window, operand 1, single buffered']
    #allocation6 [shape = 's32[1]{0}', space=sflag, size = 0x4, scoped, tag = 'scoped memory for simple_nn_forward.1']
    #allocation7 [shape = 'u8[2048]{0}', space=vmem, size = 0x800, scoped, tag = 'output window, operand 0, single buffered']
    %7 = vsyncpa [#allocation3], 0
    %8 = vsyncpa [#allocation6], 0
    %9 = vsyncpa [#allocation4], 0
    // Predicated region
    $region2: #{simple_nn_forward.1} parent=1 // pred_check
      _
    $region3: #{simple_nn_forward.1} parent=1 // pred_check_branch
      %11 = sbr.rel (0) target = $region5
    $region4: #{simple_nn_forward.1} parent=1 // pred_region
      %s13 = ssub.s32 128, 128
      %14 = vsyncadd [#allocation3], %s13
      %s16 = sshll.u32 [#allocation2], 4
      %s17 = int_to_ptr.vmem [resolvable:$true] %s16
      %19 = dma.hbm_to_vmem [thread:$0]  %s0, 128, %s17, [#allocation3]
    $region5: #{simple_nn_forward.1} parent=1 // pred_fallthru
      _
    // Predicated region
    $region6: #{simple_nn_forward.1} parent=1 // pred_check
      _
    $region7: #{simple_nn_forward.1} parent=1 // pred_check_branch
      %21 = sbr.rel (0) target = $region9
    $region8: #{simple_nn_forward.1} parent=1 // pred_region
      %s23 = ssub.s32 64, 64
      %24 = vsyncadd [#allocation6], %s23
      %s26 = sshll.u32 [#allocation5], 4
      %s27 = int_to_ptr.vmem [resolvable:$true] %s26
      %29 = dma.hbm_to_vmem [thread:$0]  %s1, 64, %s27, [#allocation6]
    $region9: #{simple_nn_forward.1} parent=1 // pred_fallthru
      _
    // Predicated region
    $region10: #{simple_nn_forward.1} parent=1 // pred_check
      _
    $region11: #{simple_nn_forward.1} parent=1 // pred_check_branch
      %31 = sbr.rel (0) target = $region13
    $region12: #{simple_nn_forward.1} parent=1 // pred_region
      %32 = dma.done [#allocation3], 128
    $region13: #{simple_nn_forward.1} parent=1 // pred_fallthru
      _
    // Predicated region
    $region14: #{simple_nn_forward.1} parent=1 // pred_check
      _
    $region15: #{simple_nn_forward.1} parent=1 // pred_check_branch
      %34 = sbr.rel (0) target = $region17
    $region16: #{simple_nn_forward.1} parent=1 // pred_region
      %35 = dma.done [#allocation6], 64
    $region17: #{simple_nn_forward.1} parent=1 // pred_fallthru
      _
    %v36 = vld [vmem:[#allocation2] sm:$0xff]
    %v37 = vld [vmem:[#allocation5] sm:$0x1]
    %39 = vset.pattern.permute.xlu0 0
    %40 = vperm.xlu0 %39, %v36
    %v41 = vpop.permute.xlu0 %40
    %v43 = vlaneseq
    %v44 = vshrl.u32 %v43, 7
    %v45 = vsub.s32 0, %v44
    %v46 = vrot.slane %v37, %v45
    %v47 = vmul.f32 %v41, %v46
    %48 = vset.pattern.permute.xlu0 4
    %49 = vperm.xlu0 %48, %v36
    %v50 = vpop.permute.xlu0 %49
    %v52 = vadd.f32 %v50, %v47
    %v53 = vld [vmem:[#allocation5 + $0x1] sm:$0x1]
    %54 = vset.pattern.permute.xlu0 1
    %55 = vperm.xlu0 %54, %v36
    %v56 = vpop.permute.xlu0 %55
    %v58 = vlaneseq
    %v59 = vshrl.u32 %v58, 7
    %v60 = vsub.s32 0, %v59
    %v61 = vrot.slane %v53, %v60
    %v62 = vmul.f32 %v56, %v61
    %v63 = vadd.f32 %v52, %v62
    %v64 = vld [vmem:[#allocation5 + $0x2] sm:$0x1]
    %65 = vset.pattern.permute.xlu0 2
    %66 = vperm.xlu0 %65, %v36
    %v67 = vpop.permute.xlu0 %66
    %v69 = vlaneseq
    %v70 = vshrl.u32 %v69, 7
    %v71 = vsub.s32 0, %v70
    %v72 = vrot.slane %v64, %v71
    %v73 = vmul.f32 %v67, %v72
    %v74 = vadd.f32 %v63, %v73
    %v75 = vld [vmem:[#allocation5 + $0x3] sm:$0x1]
    %76 = vset.pattern.permute.xlu0 3
    %77 = vperm.xlu0 %76, %v36
    %v78 = vpop.permute.xlu0 %77
    %v80 = vlaneseq
    %v81 = vshrl.u32 %v80, 7
    %v82 = vsub.s32 0, %v81
    %v83 = vrot.slane %v75, %v82
    %v84 = vmul.f32 %v78, %v83
    %v85 = vadd.f32 %v74, %v84
    %v86 = vmax.f32 %v85, 0.0
    %87 = vset.pattern.permute.xlu0 5
    %88 = vperm.xlu0 %87, %v36
    %v89 = vpop.permute.xlu0 %88
    %v91 = vlaneseq
    %v92 = vshrl.u32 %v91, 7
    %v93 = vsub.s32 0, %v92
    %v94 = vrot.slane %v86, %v93
    %v95 = vmul.f32 %v89, %v94
    %96 = vset.pattern.permute.xlu0 8
    %97 = vperm.xlu0 %96, %v36
    %v98 = vpop.permute.xlu0 %97
    %v100 = vadd.f32 %v98, %v95
    %101 = vset.pattern.permute.xlu0 6
    %102 = vperm.xlu0 %101, %v36
    %v103 = vpop.permute.xlu0 %102
    %v105 = vlaneseq
    %v106 = vshrl.u32 %v105, 7
    %v107 = vsub.s32 1, %v106
    %v108 = vrot.slane %v86, %v107
    %v109 = vmul.f32 %v103, %v108
    %v110 = vadd.f32 %v100, %v109
    %111 = vset.pattern.permute.xlu0 7
    %112 = vperm.xlu0 %111, %v36
    %v113 = vpop.permute.xlu0 %112
    %v115 = vlaneseq
    %v116 = vshrl.u32 %v115, 7
    %v117 = vsub.s32 2, %v116
    %v118 = vrot.slane %v86, %v117
    %v119 = vmul.f32 %v113, %v118
    %v120 = vadd.f32 %v110, %v119
    %v121 = vmax.f32 %v120, 0.0
    %122 = vset.pattern.permute.xlu0 9
    %123 = vperm.xlu0 %122, %v36
    %v124 = vpop.permute.xlu0 %123
    %v126 = vlaneseq
    %v127 = vshrl.u32 %v126, 7
    %v128 = vsub.s32 0, %v127
    %v129 = vrot.slane %v121, %v128
    %v130 = vmul.f32 %v124, %v129
    %131 = vset.pattern.permute.xlu0 11
    %132 = vperm.xlu0 %131, %v36
    %v133 = vpop.permute.xlu0 %132
    %v135 = vadd.f32 %v133, %v130
    %136 = vset.pattern.permute.xlu0 10
    %137 = vperm.xlu0 %136, %v36
    %v138 = vpop.permute.xlu0 %137
    %v140 = vlaneseq
    %v141 = vshrl.u32 %v140, 7
    %v142 = vsub.s32 1, %v141
    %v143 = vrot.slane %v121, %v142
    %v144 = vmul.f32 %v138, %v143
    %v145 = vadd.f32 %v135, %v144
    %vm146 = vcmask 60416
    %147 = vst.msk [vmem:[#allocation7] sm:$0xf] %vm146, %v145
    // Predicated region
    $region18: #{simple_nn_forward.1} parent=1 // pred_check
      _
    $region19: #{simple_nn_forward.1} parent=1 // pred_check_branch
      %149 = sbr.rel (0) target = $region21
    $region20: #{simple_nn_forward.1} parent=1 // pred_region
      %s151 = ssub.s32 64, 64
      %152 = vsyncadd [#allocation4], %s151
      %s154 = sshll.u32 [#allocation7], 4
      %s155 = int_to_ptr.vmem [resolvable:$true] %s154
      %157 = dma.vmem_to_hbm [thread:$0]  %s155, 64, %s2, [#allocation4]
    $region21: #{simple_nn_forward.1} parent=1 // pred_fallthru
      _
    // Predicated region
    $region22: #{simple_nn_forward.1} parent=1 // pred_check
      _
    $region23: #{simple_nn_forward.1} parent=1 // pred_check_branch
      %159 = sbr.rel (0) target = $region25
    $region24: #{simple_nn_forward.1} parent=1 // pred_region
      %160 = dma.done [#allocation4], 64
    $region25: #{simple_nn_forward.1} parent=1 // pred_fallthru
      _
    %161 = vsyncpa [#allocation3], 1
    %162 = vsyncpa [#allocation6], 1
    %163 = vsyncpa [#allocation4], 1

</llo_original>
